<compile_context>
chip_gen: v7x
topology: tpu7x:2x2x1
jax: 0.10.0
libtpu: 0.0.40
codegen_flags: <defaults>
</compile_context>

<pallas_src>
import functools

import numpy as np
import jax
import jax.numpy as jnp
from jax.experimental import pallas as pl
from jax.experimental.pallas import tpu as pltpu


# --------------------------------------------------------------------------
# Pallas kernel
# --------------------------------------------------------------------------

def _graph_model_kernel(x_ref, wa_ref, wm_ref, wch_ref, bru_ref, bc_ref,
                        gamma_ref, out_ref, *, n_node, chnn, cdtype):
    """One (batch, spatial-tile) block: the full GraphModel forward.

    x_ref   : (1, N*C, T)  feature slab -- node/channel rows on sublanes, pixels on lanes
    wa_ref  : (2*G*N*C + 2*N*C, N*C)  fused "everything that multiplies h" weight (bf16)
    wm_ref  : (3*N*C, N*C)            fused "everything that multiplies m" weight (bf16)
    wch_ref : (N*C, N*C)              candidate (r*h)-weight, block-diag over nodes (bf16)
    bru_ref : (2*N*C, 1) f32, bc_ref : (N*C, 1) f32, gamma_ref : (1,1) f32 in SMEM
    out_ref : (1, N*C, T)
    """
    N, C = n_node, chnn
    G = N - 1
    NC = N * C
    GNC = G * NC

    f = x_ref[0]                                    # (NC, T) f32
    fb = f.astype(cdtype)                           # bf16 operand for the MXU
    gamma = gamma_ref[0, 0]

    # --- ONE fused matmul over the feature slab -------------------------------------
    #   rows [0, GNC)          : edge-gate logits, already expanded to message channels
    #                            (<wcwgt[g'], f[idx] - f[gate_nbr]>, g' = (n*C+c) % G)
    #   rows [GNC, 2*GNC)      : neighbor-feature permutation (message numerators)
    #   rows [2*GNC, +2*NC)    : h-contribution of the fused reset|update gates
    a = jnp.dot(wa_ref[...], fb, preferred_element_type=jnp.float32)

    sig = jax.nn.sigmoid(a[:GNC])                   # (GNC, T) expanded edge gates
    prod = a[GNC:2 * GNC] * sig                     # gated neighbor features
    m = prod[0:NC]                                  # sum over neighbor slots -> (NC, T)
    for n in range(1, G):
        m = m + prod[n * NC:(n + 1) * NC]

    gates_h = a[2 * GNC:2 * GNC + 2 * NC]           # (2*NC, T)

    # --- fused ConvGRU (kernel_size=1) on the stacked slab, block-diag weights -------
    #   wm rows [0, 2*NC) : reset|update gate m-contribution
    #   wm rows [2*NC, ..): candidate m-contribution
    bm = jnp.dot(wm_ref[...], m.astype(cdtype), preferred_element_type=jnp.float32)
    gates = jax.nn.sigmoid(bm[:2 * NC] + gates_h + bru_ref[...])
    r = gates[0:NC]
    u = gates[NC:2 * NC]

    rh = (r * f).astype(cdtype)
    ch = jnp.dot(wch_ref[...], rh, preferred_element_type=jnp.float32)   # (NC, T)
    cand = jnp.tanh(bm[2 * NC:] + ch + bc_ref[...])

    h_next = (1.0 - u) * f + u * cand
    out_ref[0] = h_next * gamma + f                 # single dense lane-aligned store


# --------------------------------------------------------------------------
# Host-side fused-weight construction (tiny, done once at trace time)
# --------------------------------------------------------------------------

def _build_fused_weights(params, N, C, compute_dtype):
    G, NC = N - 1, N * C
    wcwgt = params['wcwgt']                       # (G, C)   grouped 1x1 conv weight
    wg, bg = params['wg'], params['bg']           # (2C, 2C), (2C,)  ConvGRU gate conv
    wcan, bcan = params['wcan'], params['bcan']   # (C, 2C),  (C,)   ConvGRU candidate conv

    # Static index tables for the expanded edge-gate / message mapping.
    # Row r = (neighbor slot n, destination node idx, channel c):
    #   gate uses C_wgt group g' = (n*C + c) % G, computed from f[idx] - f[nbrs(idx)[g']],
    #   the gated feature comes from neighbor slot n:  f[nbrs(idx)[n], c].
    rows = G * NC
    grp = np.zeros(rows, np.int32)
    gate_nbr = np.zeros(rows, np.int32)
    feat_nbr = np.zeros(rows, np.int32)
    dst = np.zeros(rows, np.int32)
    chn = np.zeros(rows, np.int32)
    for n in range(G):
        for idx in range(N):
            nbrs = [ii for ii in range(N) if ii != idx]
            for c in range(C):
                r = n * NC + idx * C + c
                g = (n * C + c) % G
                grp[r] = g
                gate_nbr[r] = nbrs[g]
                feat_nbr[r] = nbrs[n]
                dst[r] = idx
                chn[r] = c

    # w_edge @ f_slab == <wcwgt[g'], f[idx] - f[gate_nbr]>  for every expanded row.
    node_oh = np.eye(N, dtype=np.float32)
    sign = jnp.asarray(node_oh[dst] - node_oh[gate_nbr])                    # (rows, N)
    w_edge = (sign[:, :, None] * wcwgt[jnp.asarray(grp)][:, None, :]).reshape(rows, NC)

    # p_msg @ f_slab == f[feat_nbr, c]   (pure 0/1 row permutation of the feature slab).
    p_msg = np.zeros((rows, NC), np.float32)
    p_msg[np.arange(rows), feat_nbr * C + chn] = 1.0
    p_msg = jnp.asarray(p_msg)

    # Block-diagonal (over nodes) ConvGRU weights acting on the stacked (N*C, T) slab.
    eye_n = jnp.eye(N, dtype=wg.dtype)
    bd = lambda blk: jnp.kron(eye_n, blk)
    w_ru_m = jnp.concatenate([bd(wg[:C, :C]), bd(wg[C:, :C])], axis=0)      # (2NC, NC)
    w_ru_h = jnp.concatenate([bd(wg[:C, C:]), bd(wg[C:, C:])], axis=0)      # (2NC, NC)
    w_c_m = bd(wcan[:, :C])                                                 # (NC, NC)
    w_c_h = bd(wcan[:, C:])                                                 # (NC, NC)

    b_ru = jnp.concatenate([jnp.tile(bg[:C], N), jnp.tile(bg[C:], N)]).reshape(2 * NC, 1)
    b_c = jnp.tile(bcan, N).reshape(NC, 1)

    return dict(
        # everything multiplying the feature slab, fused into ONE matmul
        w_a=jnp.concatenate([w_edge, p_msg, w_ru_h], axis=0).astype(compute_dtype),
        # everything multiplying the message slab, fused into ONE matmul
        w_m=jnp.concatenate([w_ru_m, w_c_m], axis=0).astype(compute_dtype),
        w_ch=w_c_h.astype(compute_dtype),
        b_ru=b_ru.astype(jnp.float32),
        b_c=b_c.astype(jnp.float32),
    )


# --------------------------------------------------------------------------
# Tile / VMEM budgeting (generation-aware)
# --------------------------------------------------------------------------

def _round_up(x, m):
    return ((x + m - 1) // m) * m


def _vmem_capacity_bytes():
    """Physical VMEM per TensorCore; conservative v7x fallback if the query fails."""
    try:
        cap = getattr(pltpu.get_tpu_info(), "vmem_capacity_bytes", None)
        if cap:
            return int(cap)
    except Exception:
        pass
    return 64 * 1024 * 1024


def _select_tile(hw, batch, nc, g):
    """Pick spatial tile T (multiple of 128) and vmem_limit from actual block bytes."""
    # f32 rows live per spatial lane: double-buffered in/out blocks + stacked temporaries.
    io_rows = 2 * 2 * nc                               # in + out blocks, double-buffered
    tmp_rows = 3 * g * nc + 4 * nc + 3 * 2 * nc        # a, prod, m/rh/cand, bm/gates
    bytes_per_lane = 4 * (io_rows + tmp_rows)

    cap = _vmem_capacity_bytes()
    budget = min(cap // 3, 40 * 1024 * 1024)           # headroom for DMA buffers / spills
    t_cap = (budget // (2 * bytes_per_lane)) // 128 * 128
    t_cap = max(128, min(16384, t_cap))

    t = min(t_cap, _round_up(hw, 128))
    # v7x has 2 TensorCores: make sure the ("parallel", "parallel") grid has >= 2 steps.
    if batch * pl.cdiv(hw, t) < 2 and hw > 128:
        t = max(128, _round_up(pl.cdiv(hw, 2), 128))
    n_tiles = pl.cdiv(hw, t)

    vmem_limit = int(min(max(32 * 1024 * 1024, 2 * bytes_per_lane * t), cap * 3 // 4))
    return t, n_tiles, vmem_limit


# --------------------------------------------------------------------------
# Wrapper
# --------------------------------------------------------------------------

def graph_model_forward(inputs, params, *, compute_dtype=jnp.bfloat16):
    """inputs: (B, N, C, H, W) float32  ->  pred: (B, N, C, H, W) float32."""
    B, N, C, H, W = inputs.shape
    G, NC, HW = N - 1, N * C, H * W

    fw = _build_fused_weights(params, N, C, compute_dtype)
    T, n_tiles, vmem_limit = _select_tile(HW, B, NC, G)
    HW_pad = n_tiles * T

    x = inputs.reshape(B, NC, HW)                       # free reshape (contiguous merge)
    if HW_pad != HW:                                    # pad to whole 128-lane tiles
        x = jnp.pad(x, ((0, 0), (0, 0), (0, HW_pad - HW)))

    const = lambda b, s: (0, 0)
    out = pl.pallas_call(
        functools.partial(_graph_model_kernel, n_node=N, chnn=C, cdtype=compute_dtype),
        grid=(B, n_tiles),
        in_specs=[
            pl.BlockSpec((1, NC, T), lambda b, s: (b, 0, s)),
            pl.BlockSpec(fw['w_a'].shape, const),
            pl.BlockSpec(fw['w_m'].shape, const),
            pl.BlockSpec(fw['w_ch'].shape, const),
            pl.BlockSpec(fw['b_ru'].shape, const),
            pl.BlockSpec(fw['b_c'].shape, const),
            pl.BlockSpec(memory_space=pltpu.MemorySpace.SMEM),   # gamma scalar
        ],
        out_specs=pl.BlockSpec((1, NC, T), lambda b, s: (b, 0, s)),
        out_shape=jax.ShapeDtypeStruct((B, NC, HW_pad), jnp.float32),
        compiler_params=pltpu.CompilerParams(
            dimension_semantics=("parallel", "parallel"),
            vmem_limit_bytes=vmem_limit),
    )(x, fw['w_a'], fw['w_m'], fw['w_ch'], fw['b_ru'], fw['b_c'], params['gamma'])

    if HW_pad != HW:
        out = out[:, :, :HW]
    return out.reshape(B, N, C, H, W)


# --------------------------------------------------------------------------
# Parameter init (shapes per the module __init__) and pure-JAX reference
# --------------------------------------------------------------------------

def init_params(key, chnn, n_node):
    C = chnn
    ks = jax.random.split(key, 5)
    # GraphModel.C_wgt: grouped 1x1 conv, groups = N-1, weight (N-1, C, 1, 1) -> (N-1, C)
    wcwgt = jax.random.normal(ks[0], (n_node - 1, C), jnp.float32) * 0.1
    # ConvGRUCell (assumed standard): conv_gates (2C out, 2C in), conv_can (C out, 2C in)
    wg = jax.random.normal(ks[1], (2 * C, 2 * C), jnp.float32) * 0.1
    bg = jax.random.normal(ks[2], (2 * C,), jnp.float32) * 0.1
    wcan = jax.random.normal(ks[3], (C, 2 * C), jnp.float32) * 0.1
    bcan = jax.random.normal(ks[4], (C,), jnp.float32) * 0.1
    # NOTE: PyTorch init is gamma = 0; use a nonzero value so the GRU path is exercised.
    gamma = jnp.full((1, 1), 0.5, jnp.float32)
    return dict(wcwgt=wcwgt, wg=wg, bg=bg, wcan=wcan, bcan=bcan, gamma=gamma)


def reference_forward(inputs, params):
    """Pure-JAX f32 mirror of GraphModel.forward (channels-first, like the PyTorch spec)."""
    B, N, C, H, W = inputs.shape
    wcwgt = params['wcwgt']
    wg, bg, wcan, bcan = params['wg'], params['bg'], params['wcan'], params['bcan']
    wr, wu = wg[:C], wg[C:]
    br = bg[:C].reshape(1, C, 1, 1)
    bu = bg[C:].reshape(1, C, 1, 1)
    bc = bcan.reshape(1, C, 1, 1)
    gamma = params['gamma'][0, 0]

    feat = [inputs[:, i] for i in range(N)]
    preds = []
    for idx in range(N):
        h_t = feat[idx]
        nbrs = [ii for ii in range(N) if ii != idx]
        sig = [jax.nn.sigmoid(jnp.einsum('bchw,c->bhw', h_t - feat[nb], wcwgt[g]))
               for g, nb in enumerate(nbrs)]
        m_t = jnp.zeros_like(h_t)
        for n, nb in enumerate(nbrs):
            wgt = jnp.stack([sig[(n * C + c) % (N - 1)] for c in range(C)], axis=1)
            m_t = m_t + feat[nb] * wgt
        comb = jnp.concatenate([m_t, h_t], axis=1)
        r = jax.nn.sigmoid(jnp.einsum('oi,bihw->bohw', wr, comb) + br)
        u = jax.nn.sigmoid(jnp.einsum('oi,bihw->bohw', wu, comb) + bu)
        comb2 = jnp.concatenate([m_t, r * h_t], axis=1)
        cnm = jnp.tanh(jnp.einsum('oi,bihw->bohw', wcan, comb2) + bc)
        h_next = (1.0 - u) * h_t + u * cnm
        preds.append(h_next * gamma + h_t)
    return jnp.stack(preds, axis=1)


# --------------------------------------------------------------------------

if __name__ == "__main__":
    B, N, C, H, W = 2, 3, 4, 16, 16   # GraphModel(N=3, chnn_in=4)

    key = jax.random.PRNGKey(0)
    k_in, k_par = jax.random.split(key)
    x = jax.random.normal(k_in, (B, N, C, H, W), jnp.float32)
    params = init_params(k_par, C, N)

    fwd = jax.jit(graph_model_forward)
    out = fwd(x, params)
    jax.block_until_ready(out)
    assert out.shape == (B, N, C, H, W), out.shape

    ref = reference_forward(x, params)
    err = float(jnp.max(jnp.abs(out - ref)))
    # bf16 matmul operands (f32 accumulation) account for ~1e-2 of rounding vs the f32
    # reference; anything structurally wrong would be off by O(0.1-1).
    assert err < 3e-2, f"max abs error vs reference: {err}"
    print("KERNEL_OK")
</pallas_src>

<mosaic_0001>
module attributes {stable_mosaic.version = 11 : i64} {
  func.func @_graph_model_kernel(%arg0: i32, %arg1: i32, %arg2: memref<1x12x256xf32, #tpu.memory_space<vmem>>, %arg3: memref<72x12xbf16, #tpu.memory_space<vmem>>, %arg4: memref<36x12xbf16, #tpu.memory_space<vmem>>, %arg5: memref<12x12xbf16, #tpu.memory_space<vmem>>, %arg6: memref<24x1xf32, #tpu.memory_space<vmem>>, %arg7: memref<12x1xf32, #tpu.memory_space<vmem>>, %arg8: memref<1x1xf32, #tpu.memory_space<smem>>, %arg9: memref<1x12x256xf32, #tpu.memory_space<vmem>>) attributes {dimension_semantics = [#tpu.dimension_semantics<parallel>, #tpu.dimension_semantics<parallel>], iteration_bounds = array<i64: 2, 1>, scalar_prefetch = 0 : i64, scratch_operands = 0 : i64, tpu.core_type = #tpu.core_type<tc>, window_params = [{transform_indices = @transform_0, window_bounds = array<i64: 1, 12, 256>}, {pipeline_mode = #tpu.pipeline_mode<synchronous>, transform_indices = @transform_1, window_bounds = array<i64: 72, 12>}, {pipeline_mode = #tpu.pipeline_mode<synchronous>, transform_indices = @transform_2, window_bounds = array<i64: 36, 12>}, {pipeline_mode = #tpu.pipeline_mode<synchronous>, transform_indices = @transform_3, window_bounds = array<i64: 12, 12>}, {pipeline_mode = #tpu.pipeline_mode<synchronous>, transform_indices = @transform_4, window_bounds = array<i64: 24, 1>}, {pipeline_mode = #tpu.pipeline_mode<synchronous>, transform_indices = @transform_5, window_bounds = array<i64: 12, 1>}, {transform_indices = @transform_6, window_bounds = array<i64: 1, 1>}, {transform_indices = @transform_7, window_bounds = array<i64: 1, 12, 256>}]} {
    %c0 = arith.constant 0 : index
    %c0_0 = arith.constant 0 : index
    %c0_1 = arith.constant 0 : index
    %0 = vector.load %arg2[%c0, %c0_0, %c0_1] : memref<1x12x256xf32, #tpu.memory_space<vmem>>, vector<1x12x256xf32>
    %1 = vector.shape_cast %0 : vector<1x12x256xf32> to vector<12x256xf32>
    %2 = arith.truncf %1 : vector<12x256xf32> to vector<12x256xbf16>
    %c0_2 = arith.constant 0 : index
    %c0_3 = arith.constant 0 : index
    %3 = memref.load %arg8[%c0_2, %c0_3] : memref<1x1xf32, #tpu.memory_space<smem>>
    %c0_4 = arith.constant 0 : index
    %c0_5 = arith.constant 0 : index
    %4 = vector.load %arg3[%c0_4, %c0_5] : memref<72x12xbf16, #tpu.memory_space<vmem>>, vector<72x12xbf16>
    %cst = arith.constant dense<0.000000e+00> : vector<72x256xf32>
    %5 = tpu.matmul %4, %2, %cst {dimension_numbers = #tpu.dot_dimension_numbers<[1], [0], [0], [1], [0, 0, 1, 1], [], []>} : vector<72x12xbf16>, vector<12x256xbf16>, vector<72x256xf32> -> vector<72x256xf32>
    %6 = vector.extract_strided_slice %5 {offsets = [0, 0], sizes = [24, 256], strides = [1, 1]} : vector<72x256xf32> to vector<24x256xf32>
    %7 = arith.negf %6 : vector<24x256xf32>
    %8 = math.exp %7 : vector<24x256xf32>
    %cst_6 = arith.constant 1.000000e+00 : f32
    %9 = vector.broadcast %cst_6 : f32 to vector<24x256xf32>
    %10 = arith.addf %9, %8 : vector<24x256xf32>
    %11 = arith.divf %9, %10 : vector<24x256xf32>
    %12 = vector.extract_strided_slice %5 {offsets = [24, 0], sizes = [24, 256], strides = [1, 1]} : vector<72x256xf32> to vector<24x256xf32>
    %13 = arith.mulf %12, %11 : vector<24x256xf32>
    %14 = vector.extract_strided_slice %13 {offsets = [0, 0], sizes = [12, 256], strides = [1, 1]} : vector<24x256xf32> to vector<12x256xf32>
    %15 = vector.extract_strided_slice %13 {offsets = [12, 0], sizes = [12, 256], strides = [1, 1]} : vector<24x256xf32> to vector<12x256xf32>
    %16 = arith.addf %14, %15 : vector<12x256xf32>
    %17 = vector.extract_strided_slice %5 {offsets = [48, 0], sizes = [24, 256], strides = [1, 1]} : vector<72x256xf32> to vector<24x256xf32>
    %c0_7 = arith.constant 0 : index
    %c0_8 = arith.constant 0 : index
    %18 = vector.load %arg4[%c0_7, %c0_8] : memref<36x12xbf16, #tpu.memory_space<vmem>>, vector<36x12xbf16>
    %19 = arith.truncf %16 : vector<12x256xf32> to vector<12x256xbf16>
    %cst_9 = arith.constant dense<0.000000e+00> : vector<36x256xf32>
    %20 = tpu.matmul %18, %19, %cst_9 {dimension_numbers = #tpu.dot_dimension_numbers<[1], [0], [0], [1], [0, 0, 1, 1], [], []>} : vector<36x12xbf16>, vector<12x256xbf16>, vector<36x256xf32> -> vector<36x256xf32>
    %21 = vector.extract_strided_slice %20 {offsets = [0, 0], sizes = [24, 256], strides = [1, 1]} : vector<36x256xf32> to vector<24x256xf32>
    %22 = arith.addf %21, %17 : vector<24x256xf32>
    %c0_10 = arith.constant 0 : index
    %c0_11 = arith.constant 0 : index
    %23 = vector.load %arg6[%c0_10, %c0_11] : memref<24x1xf32, #tpu.memory_space<vmem>>, vector<24x1xf32>
    %24 = vector.broadcast %23 : vector<24x1xf32> to vector<24x256xf32>
    %25 = arith.addf %22, %24 : vector<24x256xf32>
    %26 = arith.negf %25 : vector<24x256xf32>
    %27 = math.exp %26 : vector<24x256xf32>
    %cst_12 = arith.constant 1.000000e+00 : f32
    %28 = vector.broadcast %cst_12 : f32 to vector<24x256xf32>
    %29 = arith.addf %28, %27 : vector<24x256xf32>
    %30 = arith.divf %28, %29 : vector<24x256xf32>
    %31 = vector.extract_strided_slice %30 {offsets = [0, 0], sizes = [12, 256], strides = [1, 1]} : vector<24x256xf32> to vector<12x256xf32>
    %32 = vector.extract_strided_slice %30 {offsets = [12, 0], sizes = [12, 256], strides = [1, 1]} : vector<24x256xf32> to vector<12x256xf32>
    %33 = arith.mulf %31, %1 : vector<12x256xf32>
    %34 = arith.truncf %33 : vector<12x256xf32> to vector<12x256xbf16>
    %c0_13 = arith.constant 0 : index
    %c0_14 = arith.constant 0 : index
    %35 = vector.load %arg5[%c0_13, %c0_14] : memref<12x12xbf16, #tpu.memory_space<vmem>>, vector<12x12xbf16>
    %cst_15 = arith.constant dense<0.000000e+00> : vector<12x256xf32>
    %36 = tpu.matmul %35, %34, %cst_15 {dimension_numbers = #tpu.dot_dimension_numbers<[1], [0], [0], [1], [0, 0, 1, 1], [], []>} : vector<12x12xbf16>, vector<12x256xbf16>, vector<12x256xf32> -> vector<12x256xf32>
    %37 = vector.extract_strided_slice %20 {offsets = [24, 0], sizes = [12, 256], strides = [1, 1]} : vector<36x256xf32> to vector<12x256xf32>
    %38 = arith.addf %37, %36 : vector<12x256xf32>
    %c0_16 = arith.constant 0 : index
    %c0_17 = arith.constant 0 : index
    %39 = vector.load %arg7[%c0_16, %c0_17] : memref<12x1xf32, #tpu.memory_space<vmem>>, vector<12x1xf32>
    %40 = vector.broadcast %39 : vector<12x1xf32> to vector<12x256xf32>
    %41 = arith.addf %38, %40 : vector<12x256xf32>
    %42 = math.tanh %41 : vector<12x256xf32>
    %cst_18 = arith.constant 1.000000e+00 : f32
    %43 = vector.broadcast %cst_18 : f32 to vector<12x256xf32>
    %44 = arith.subf %43, %32 : vector<12x256xf32>
    %45 = arith.mulf %44, %1 : vector<12x256xf32>
    %46 = arith.mulf %32, %42 : vector<12x256xf32>
    %47 = arith.addf %45, %46 : vector<12x256xf32>
    %48 = vector.broadcast %3 : f32 to vector<12x256xf32>
    %49 = arith.mulf %47, %48 : vector<12x256xf32>
    %50 = arith.addf %49, %1 : vector<12x256xf32>
    %c0_19 = arith.constant 0 : index
    %c0_20 = arith.constant 0 : index
    %c0_21 = arith.constant 0 : index
    %51 = vector.load %arg9[%c0_19, %c0_20, %c0_21] : memref<1x12x256xf32, #tpu.memory_space<vmem>>, vector<1x12x256xf32>
    %52 = vector.shape_cast %51 : vector<1x12x256xf32> to vector<12x256xf32>
    %53 = vector.shape_cast %50 : vector<12x256xf32> to vector<1x12x256xf32>
    tpu.vector_store %arg9[%c0_19, %c0_20, %c0_21], %53 {strides = array<i32>} : memref<1x12x256xf32, #tpu.memory_space<vmem>>, vector<1x12x256xf32>,
    return
  }
  func.func @transform_0(%arg0: i32, %arg1: i32) -> (i32, i32, i32) {
    %c0_i32 = arith.constant 0 : i32
    %c0_i32_0 = arith.constant 0 : i32
    return %arg0, %c0_i32, %arg1 : i32, i32, i32
  }
  func.func @transform_1(%arg0: i32, %arg1: i32) -> (i32, i32) {
    %c0_i32 = arith.constant 0 : i32
    %c0_i32_0 = arith.constant 0 : i32
    %c0_i32_1 = arith.constant 0 : i32
    return %c0_i32, %c0_i32_0 : i32, i32
  }
  func.func @transform_2(%arg0: i32, %arg1: i32) -> (i32, i32) {
    %c0_i32 = arith.constant 0 : i32
    %c0_i32_0 = arith.constant 0 : i32
    %c0_i32_1 = arith.constant 0 : i32
    return %c0_i32, %c0_i32_0 : i32, i32
  }
  func.func @transform_3(%arg0: i32, %arg1: i32) -> (i32, i32) {
    %c0_i32 = arith.constant 0 : i32
    %c0_i32_0 = arith.constant 0 : i32
    %c0_i32_1 = arith.constant 0 : i32
    return %c0_i32, %c0_i32_0 : i32, i32
  }
  func.func @transform_4(%arg0: i32, %arg1: i32) -> (i32, i32) {
    %c0_i32 = arith.constant 0 : i32
    %c0_i32_0 = arith.constant 0 : i32
    %c0_i32_1 = arith.constant 0 : i32
    return %c0_i32, %c0_i32_0 : i32, i32
  }
  func.func @transform_5(%arg0: i32, %arg1: i32) -> (i32, i32) {
    %c0_i32 = arith.constant 0 : i32
    %c0_i32_0 = arith.constant 0 : i32
    %c0_i32_1 = arith.constant 0 : i32
    return %c0_i32, %c0_i32_0 : i32, i32
  }
  func.func @transform_6(%arg0: i32, %arg1: i32) -> (i32, i32) {
    %c0_i32 = arith.constant 0 : i32
    %c0_i32_0 = arith.constant 0 : i32
    %c0_i32_1 = arith.constant 0 : i32
    return %c0_i32, %c0_i32_0 : i32, i32
  }
  func.func @transform_7(%arg0: i32, %arg1: i32) -> (i32, i32, i32) {
    %c0_i32 = arith.constant 0 : i32
    %c0_i32_0 = arith.constant 0 : i32
    return %arg0, %c0_i32, %arg1 : i32, i32, i32
  }
}

</mosaic_0001>

<llo_original>
// kernel: tile.18
$region0: #{tile.18}
  #allocation0 [shape = 's32[1]{0}', space=sflag, size = 0x4, scoped, tag = 'scoped memory for tile.18']
  %s0 = inlined_call_operand.vmem [shape: f32[4], index: 0, kind: input, shape index: {}]
  %s1 = inlined_call_operand.vmem [shape: f32[3,4], index: 1, kind: output, shape index: {}]
  // Predicated region
  $region2: #{tile.18} parent=0 // pred_check
    _
  $region3: #{tile.18} parent=0 // pred_check_branch
    %3 = sbr.rel (0) target = $region5
  $region4: #{tile.18} parent=0 // pred_region
    _
  $region5: #{tile.18} parent=0 // pred_fallthru
    _
  %v4 = vld [vmem:[%s0] ss:$0 sm:$0xff]
  %5 = vst [vmem:[%s1] sm:$0xf] %v4

// kernel: tile.19
$region0: #{tile.19}
  %s0 = inlined_call_operand.vmem [shape: f32[3,4], index: 0, kind: input, shape index: {}]
  %s1 = inlined_call_operand.vmem [shape: f32[12], index: 1, kind: output, shape index: {}]
  $region1: #{tile.19} parent=0
    #allocation0 [shape = 'u8[4096]{0}', space=vmem, size = 0x1000, scoped, tag = 'scoped mem for output reshape']
    #allocation1 [shape = 'u8[4096]{0}', space=vmem, size = 0x1000, scoped, tag = 'scoped mem for input reshape']
    %s3 = sshllo.u32 0, 4
    %v4 = vld [vmem:[%s0] sm:%s3]
    %5 = vst [vmem:[#allocation1] sm:%s3] %v4
    %v6 = vld [vmem:[#allocation1] sm:$0x1]
    %vm7 = vcmask 31744
    %8 = vst.msk [vmem:[#allocation0] sm:$0x1] %vm7, %v6
    %s9 = scalar_lea.vmem [#allocation1], 2
    %v10 = vld [vmem:[%s9] sm:$0x1]
    %11 = vrot.lane.b32.xlu0 %v10, 8
    %v12 = vpop.permute.xlu0 %11
    %vm13 = vcmask 97344
    %14 = vst.msk [vmem:[#allocation0] sm:$0x1] %vm13, %v12
    %s15 = scalar_lea.vmem [#allocation1], 1
    %v16 = vld [vmem:[%s15] sm:$0x1]
    %17 = vrot.lane.b32.xlu0 %v16, 4
    %v18 = vpop.permute.xlu0 %17
    %vm19 = vcmask 64544
    %20 = vst.msk [vmem:[#allocation0] sm:$0x1] %vm19, %v18
    %s22 = sshllo.u32 0, 1
    %v24 = vld [vmem:[#allocation0] sm:%s22]
    %s25 = sshllo.u32 0, 1
    %26 = vst [vmem:[%s1] sm:%s25] %v24

// kernel: tile.0
$region0: #{tile.0}
  %s0 = inlined_call_operand.vmem [shape: f32[3,4], index: 0, kind: input, shape index: {}]
  %s1 = inlined_call_operand.vmem [shape: f32[12,1], index: 1, kind: output, shape index: {}]
  $region1: #{tile.0} parent=0
    #allocation0 [shape = 'u8[4096]{0}', space=vmem, size = 0x1000, scoped, tag = 'scoped mem for input reshape']
    %s3 = sshllo.u32 0, 4
    %v4 = vld [vmem:[%s0] sm:%s3]
    %5 = vst [vmem:[#allocation0] sm:%s3] %v4
    %v6 = vld [vmem:[#allocation0] sm:$0x7]
    %vm7 = vcmask 7168
    %8 = vst.msk [vmem:[%s1] ss:$4 sm:$0x7] %vm7, %v6
    %v9 = vld [vmem:[#allocation0] sm:$0x7]
    %10 = vrot.lane.b32.xlu0 %v9, 127
    %v11 = vpop.permute.xlu0 %10
    %vm12 = vcmask 7168
    %s13 = scalar_lea.vmem %s1, 1
    %14 = vst.msk [vmem:[%s13] ss:$4 sm:$0x7] %vm12, %v11
    %v15 = vld [vmem:[#allocation0] sm:$0x7]
    %16 = vrot.lane.b32.xlu0 %v15, 126
    %v17 = vpop.permute.xlu0 %16
    %vm18 = vcmask 7168
    %s19 = scalar_lea.vmem %s1, 2
    %20 = vst.msk [vmem:[%s19] ss:$4 sm:$0x7] %vm18, %v17
    %v21 = vld [vmem:[#allocation0] sm:$0x7]
    %22 = vrot.lane.b32.xlu0 %v21, 125
    %v23 = vpop.permute.xlu0 %22
    %vm24 = vcmask 7168
    %s25 = scalar_lea.vmem %s1, 3
    %26 = vst.msk [vmem:[%s25] ss:$4 sm:$0x7] %vm24, %v23

// kernel: graph_model_forward.1
$region0: #{graph_model_forward.1}
  #allocation0 [shape = 'u32[]', space=smem, size = 0x4, offset = 0x4, fixed_abs, tag = 'smem constant byte address 0x4 - core index']
  #allocation1 [shape = 'u32[144,128]{1,0:T(1,128)}', space=vmem, size = 0x12000, scoped, tag = 'internal scratch']
  #allocation2 [shape = 'f32[1,1]{1,0:T(1,128)S(6)}', space=smem, size = 0x200, scoped, tag = 'scoped memory for graph_model_forward.1']
  %s0 = inlined_call_operand.vmem [shape: f32[2,12,256], index: 0, kind: input, shape index: {}]
  %s1 = inlined_call_operand.vmem [shape: bf16[72,12], index: 1, kind: input, shape index: {}]
  %s2 = inlined_call_operand.vmem [shape: bf16[36,12], index: 2, kind: input, shape index: {}]
  %s3 = inlined_call_operand.vmem [shape: bf16[12,12], index: 3, kind: input, shape index: {}]
  %s4 = inlined_call_operand.vmem [shape: f32[24,1], index: 4, kind: input, shape index: {}]
  %s5 = inlined_call_operand.vmem [shape: f32[12,1], index: 5, kind: input, shape index: {}]
  %s6 = inlined_call_operand.<no memory space> [shape: f32[1,1], index: 6, kind: input, shape index: {}]
  %s7 = inlined_call_operand.vmem [shape: f32[2,12,256], index: 7, kind: output, shape index: {}]
  %s8 = sld [smem:[#allocation0]]
  $region61: #{graph_model_forward.1} parent=0
    _
  %s10 = ssub.s32 1, %s8
  %s11 = scalar_select 0, %s10, %s8
  %12 = sst [smem:[#allocation2]] %s6
  loop: start=0, step=1, limit=4
  $region2: #{graph_model_forward.1} parent=0 // loop_pre_header
    _
  $region3: #{graph_model_forward.1} parent=0 // loop_header
    %s14 = sphi 0, %s18
    %p15 = scmp.ge.s32.totalorder %s14, 4
    %s21 = sphi 0, %s33
    %s22 = sphi 0, %s29
    %s23 = sphi 0, %s21
    %s24 = sphi 0, %s22
    %s25 = sphi 0, %s23
    %s26 = sphi 0, %s24
    %s38 = sphi 0, %s40
    %s41 = sphi 0, %s38
    %s42 = sphi 0, %s41
    %s58 = sphi 0, %s42
    %s62 = sphi 0, %s62
    %s64 = sphi 0, %s62
    %s65 = sphi 0, %s64
    %s79 = sphi 0, %s65
    %s83 = sphi 0, %s83
    %s85 = sphi 0, %s83
    %s86 = sphi 0, %s85
    %s100 = sphi 0, %s86
    %s104 = sphi 0, %s104
    %s106 = sphi 0, %s104
    %s107 = sphi 0, %s106
    %s121 = sphi 0, %s107
    %s125 = sphi 0, %s125
    %s127 = sphi 0, %s125
    %s128 = sphi 0, %s127
    %s142 = sphi 0, %s128
    %s146 = sphi 0, %s146
    %s148 = sphi 0, %s146
    %s149 = sphi 0, %s148
    %s163 = sphi 0, %s149
    %s167 = sphi 0, %s167
    %s169 = sphi 0, %s167
    %s170 = sphi 0, %s169
    %s184 = sphi 0, %s170
    %s192 = sphi 0, %s194
    %s195 = sphi 0, %s192
    %s196 = sphi 0, %s195
    %s212 = sphi 0, %s196
  $region4: #{graph_model_forward.1} parent=0 // loop_header_branch
    %17 = sbr.rel (%p15) target = $region8
  $region5: #{graph_model_forward.1} parent=0 // loop_body
    %s19 = ssub.s32 %s14, 1
    %s20 = ssub.s32 %s14, 2
    %s27 = sadd.s32 1, %s22
    %p28 = scmp.ge.s32.totalorder %s27, 1
    %s29 = scalar_select %p28, 0, %s27
    %s30 = sadd.s32 1, %s21
    %s31 = scalar_select %p28, %s30, %s21
    %p32 = scmp.ge.s32.totalorder %s31, 2
    %s33 = scalar_select %p32, 0, %s31
    %s34 = ssub.s32 %s21, %s33
    %s35 = ssub.s32 %s22, %s29
    %s36 = sor.u32 %s34, %s35
    %p37 = scmp.eq.s32.totalorder %s36, 0
    %s39 = sadd.s32 %s38, 1
    %s40 = scalar_select %p37, %s38, %s39
    %p43 = pneg %p37
    %p44 = scmp.eq.s32.totalorder %s14, 1
    %p45 = por %p43, %p44
    %p46 = scmp.ne.s32.totalorder %s38, %s41
    %p47 = scmp.eq.s32.totalorder %s14, 0
    %p48 = por %p46, %p47
    %p49 = scmp.ne.s32.totalorder %s38, %s41
    %p50 = scmp.eq.s32.totalorder %s19, 1
    %p51 = por %p49, %p50
    %p52 = scmp.ne.s32.totalorder %s41, %s42
    %p53 = scmp.eq.s32.totalorder %s19, 0
    %p54 = por %p52, %p53
    %p55 = scmp.ne.s32.totalorder %s41, %s42
    %p56 = scmp.eq.s32.totalorder %s20, 1
    %p57 = por %p55, %p56
    %p59 = scmp.ne.s32.totalorder %s42, %s58
    %p60 = scmp.eq.s32.totalorder %s20, 0
    %p61 = por %p59, %p60
    %s63 = sadd.s32 %s62, 1
    %p66 = scmp.eq.s32.totalorder %s14, 1
    %p67 = scmp.ne.s32.totalorder %s62, %s64
    %p68 = scmp.eq.s32.totalorder %s14, 0
    %p69 = por %p67, %p68
    %p70 = scmp.ne.s32.totalorder %s62, %s64
    %p71 = scmp.eq.s32.totalorder %s19, 1
    %p72 = por %p70, %p71
    %p73 = scmp.ne.s32.totalorder %s64, %s65
    %p74 = scmp.eq.s32.totalorder %s19, 0
    %p75 = por %p73, %p74
    %p76 = scmp.ne.s32.totalorder %s64, %s65
    %p77 = scmp.eq.s32.totalorder %s20, 1
    %p78 = por %p76, %p77
    %p80 = scmp.ne.s32.totalorder %s65, %s79
    %p81 = scmp.eq.s32.totalorder %s20, 0
    %p82 = por %p80, %p81
    %s84 = sadd.s32 %s83, 1
    %p87 = scmp.eq.s32.totalorder %s14, 1
    %p88 = scmp.ne.s32.totalorder %s83, %s85
    %p89 = scmp.eq.s32.totalorder %s14, 0
    %p90 = por %p88, %p89
    %p91 = scmp.ne.s32.totalorder %s83, %s85
    %p92 = scmp.eq.s32.totalorder %s19, 1
    %p93 = por %p91, %p92
    %p94 = scmp.ne.s32.totalorder %s85, %s86
    %p95 = scmp.eq.s32.totalorder %s19, 0
    %p96 = por %p94, %p95
    %p97 = scmp.ne.s32.totalorder %s85, %s86
    %p98 = scmp.eq.s32.totalorder %s20, 1
    %p99 = por %p97, %p98
    %p101 = scmp.ne.s32.totalorder %s86, %s100
    %p102 = scmp.eq.s32.totalorder %s20, 0
    %p103 = por %p101, %p102
    %s105 = sadd.s32 %s104, 1
    %p108 = scmp.eq.s32.totalorder %s14, 1
    %p109 = scmp.ne.s32.totalorder %s104, %s106
    %p110 = scmp.eq.s32.totalorder %s14, 0
    %p111 = por %p109, %p110
    %p112 = scmp.ne.s32.totalorder %s104, %s106
    %p113 = scmp.eq.s32.totalorder %s19, 1
    %p114 = por %p112, %p113
    %p115 = scmp.ne.s32.totalorder %s106, %s107
    %p116 = scmp.eq.s32.totalorder %s19, 0
    %p117 = por %p115, %p116
    %p118 = scmp.ne.s32.totalorder %s106, %s107
    %p119 = scmp.eq.s32.totalorder %s20, 1
    %p120 = por %p118, %p119
    %p122 = scmp.ne.s32.totalorder %s107, %s121
    %p123 = scmp.eq.s32.totalorder %s20, 0
    %p124 = por %p122, %p123
    %s126 = sadd.s32 %s125, 1
    %p129 = scmp.eq.s32.totalorder %s14, 1
    %p130 = scmp.ne.s32.totalorder %s125, %s127
    %p131 = scmp.eq.s32.totalorder %s14, 0
    %p132 = por %p130, %p131
    %p133 = scmp.ne.s32.totalorder %s125, %s127
    %p134 = scmp.eq.s32.totalorder %s19, 1
    %p135 = por %p133, %p134
    %p136 = scmp.ne.s32.totalorder %s127, %s128
    %p137 = scmp.eq.s32.totalorder %s19, 0
    %p138 = por %p136, %p137
    %p139 = scmp.ne.s32.totalorder %s127, %s128
    %p140 = scmp.eq.s32.totalorder %s20, 1
    %p141 = por %p139, %p140
    %p143 = scmp.ne.s32.totalorder %s128, %s142
    %p144 = scmp.eq.s32.totalorder %s20, 0
    %p145 = por %p143, %p144
    %s147 = sadd.s32 %s146, 1
    %p150 = scmp.eq.s32.totalorder %s14, 1
    %p151 = scmp.ne.s32.totalorder %s146, %s148
    %p152 = scmp.eq.s32.totalorder %s14, 0
    %p153 = por %p151, %p152
    %p154 = scmp.ne.s32.totalorder %s146, %s148
    %p155 = scmp.eq.s32.totalorder %s19, 1
    %p156 = por %p154, %p155
    %p157 = scmp.ne.s32.totalorder %s148, %s149
    %p158 = scmp.eq.s32.totalorder %s19, 0
    %p159 = por %p157, %p158
    %p160 = scmp.ne.s32.totalorder %s148, %s149
    %p161 = scmp.eq.s32.totalorder %s20, 1
    %p162 = por %p160, %p161
    %p164 = scmp.ne.s32.totalorder %s149, %s163
    %p165 = scmp.eq.s32.totalorder %s20, 0
    %p166 = por %p164, %p165
    %s168 = sadd.s32 %s167, 1
    %p171 = scmp.eq.s32.totalorder %s14, 1
    %p172 = scmp.ne.s32.totalorder %s167, %s169
    %p173 = scmp.eq.s32.totalorder %s14, 0
    %p174 = por %p172, %p173
    %p175 = scmp.ne.s32.totalorder %s167, %s169
    %p176 = scmp.eq.s32.totalorder %s19, 1
    %p177 = por %p175, %p176
    %p178 = scmp.ne.s32.totalorder %s169, %s170
    %p179 = scmp.eq.s32.totalorder %s19, 0
    %p180 = por %p178, %p179
    %p181 = scmp.ne.s32.totalorder %s169, %s170
    %p182 = scmp.eq.s32.totalorder %s20, 1
    %p183 = por %p181, %p182
    %p185 = scmp.ne.s32.totalorder %s170, %s184
    %p186 = scmp.eq.s32.totalorder %s20, 0
    %p187 = por %p185, %p186
    %s188 = ssub.s32 %s21, %s33
    %s189 = ssub.s32 %s22, %s29
    %s190 = sor.u32 %s188, %s189
    %p191 = scmp.eq.s32.totalorder %s190, 0
    %s193 = sadd.s32 %s192, 1
    %s194 = scalar_select %p191, %s192, %s193
    %p197 = pneg %p191
    %p198 = scmp.eq.s32.totalorder %s14, 1
    %p199 = por %p197, %p198
    %p200 = scmp.ne.s32.totalorder %s192, %s195
    %p201 = scmp.eq.s32.totalorder %s14, 0
    %p202 = por %p200, %p201
    %p203 = scmp.ne.s32.totalorder %s192, %s195
    %p204 = scmp.eq.s32.totalorder %s19, 1
    %p205 = por %p203, %p204
    %p206 = scmp.ne.s32.totalorder %s195, %s196
    %p207 = scmp.eq.s32.totalorder %s19, 0
    %p208 = por %p206, %p207
    %p209 = scmp.ne.s32.totalorder %s195, %s196
    %p210 = scmp.eq.s32.totalorder %s20, 1
    %p211 = por %p209, %p210
    %p213 = scmp.ne.s32.totalorder %s196, %s212
    %p214 = scmp.eq.s32.totalorder %s20, 0
    %p215 = por %p213, %p214
    %p216 = scmp.le.s32.totalorder 1, %s14
    %p217 = scmp.lt.s32.totalorder %s14, 3
    %p218 = pnand %p216, %p217
    %p219 = pneg %p218
    // Predicated region
    $region9: #{graph_model_forward.1} parent=5 // pred_check
      _
    $region10: #{graph_model_forward.1} parent=5 // pred_check_branch
      %221 = sbr.rel (%p218) target = $region12
    $region11: #{graph_model_forward.1} parent=5 // pred_region
      %s222 = ssub.s32 %s14, 1
      // Predicated region
      $region13: #{graph_model_forward.1} parent=11 // pred_check
        %p223 = pneg %p75
      $region14: #{graph_model_forward.1} parent=11 // pred_check_branch
        %225 = sbr.rel (%p223) target = $region16
      $region15: #{graph_model_forward.1} parent=11 // pred_region
        _
      $region16: #{graph_model_forward.1} parent=11 // pred_fallthru
        _
      // Predicated region
      $region17: #{graph_model_forward.1} parent=11 // pred_check
        %p226 = pneg %p96
      $region18: #{graph_model_forward.1} parent=11 // pred_check_branch
        %228 = sbr.rel (%p226) target = $region20
      $region19: #{graph_model_forward.1} parent=11 // pred_region
        _
      $region20: #{graph_model_forward.1} parent=11 // pred_fallthru
        _
      // Predicated region
      $region21: #{graph_model_forward.1} parent=11 // pred_check
        %p229 = pneg %p117
      $region22: #{graph_model_forward.1} parent=11 // pred_check_branch
        %231 = sbr.rel (%p229) target = $region24
      $region23: #{graph_model_forward.1} parent=11 // pred_region
        _
      $region24: #{graph_model_forward.1} parent=11 // pred_fallthru
        _
      // Predicated region
      $region25: #{graph_model_forward.1} parent=11 // pred_check
        %p232 = pneg %p138
      $region26: #{graph_model_forward.1} parent=11 // pred_check_branch
        %234 = sbr.rel (%p232) target = $region28
      $region27: #{graph_model_forward.1} parent=11 // pred_region
        _
      $region28: #{graph_model_forward.1} parent=11 // pred_fallthru
        _
      // Predicated region
      $region29: #{graph_model_forward.1} parent=11 // pred_check
        %p235 = pneg %p159
      $region30: #{graph_model_forward.1} parent=11 // pred_check_branch
        %237 = sbr.rel (%p235) target = $region32
      $region31: #{graph_model_forward.1} parent=11 // pred_region
        _
      $region32: #{graph_model_forward.1} parent=11 // pred_fallthru
        _
      // Predicated region
      $region33: #{graph_model_forward.1} parent=11 // pred_check
        %p238 = pneg %p180
      $region34: #{graph_model_forward.1} parent=11 // pred_check_branch
        %240 = sbr.rel (%p238) target = $region36
      $region35: #{graph_model_forward.1} parent=11 // pred_region
        _
      $region36: #{graph_model_forward.1} parent=11 // pred_fallthru
        _
    $region12: #{graph_model_forward.1} parent=5 // pred_fallthru
      _
    %p241 = scmp.lt.s32.totalorder %s14, 2
    // Predicated region
    $region37: #{graph_model_forward.1} parent=5 // pred_check
      %p242 = pneg %p241
    $region38: #{graph_model_forward.1} parent=5 // pred_check_branch
      %244 = sbr.rel (%p242) target = $region40
    $region39: #{graph_model_forward.1} parent=5 // pred_region
      // Predicated region
      $region41: #{graph_model_forward.1} parent=39 // pred_check
        %p245 = pneg %p48
      $region42: #{graph_model_forward.1} parent=39 // pred_check_branch
        %247 = sbr.rel (%p245) target = $region44
      $region43: #{graph_model_forward.1} parent=39 // pred_region
        %s248 = smul.u32 2, %s22
        %p249 = scmp.lt.s32.totalorder %s21, 1
        %s250 = scalar_select %p249, %s21, 1
        %p251 = scmp.lt.s32.totalorder %s248, 1
        %s252 = scalar_select %p251, %s248, 1
        %s253 = smul.addr %s250, 4
        %s254 = sadd.s32 %s252, %s253
        %s255 = smul.addr %s254, 8
        %s256 = scalar_lea.vmem %s0, %s255
        %s257 = smul.u32 2, %s22
      $region44: #{graph_model_forward.1} parent=39 // pred_fallthru
        _
    $region40: #{graph_model_forward.1} parent=5 // pred_fallthru
      _
    %p258 = scmp.le.s32.totalorder 1, %s14
    %p259 = scmp.lt.s32.totalorder %s14, 3
    %p260 = pnand %p258, %p259
    %p261 = pneg %p260
    // Predicated region
    $region45: #{graph_model_forward.1} parent=5 // pred_check
      _
    $region46: #{graph_model_forward.1} parent=5 // pred_check_branch
      %263 = sbr.rel (%p260) target = $region48
    $region47: #{graph_model_forward.1} parent=5 // pred_region
      %s264 = ssub.s32 %s14, 1
      %s265 = smul.u32 2, %s24
      %p266 = scmp.lt.s32.totalorder %s23, 1
      %s267 = scalar_select %p266, %s23, 1
      %p268 = scmp.lt.s32.totalorder %s265, 1
      %s269 = scalar_select %p268, %s265, 1
      %s270 = smul.addr %s267, 4
      %s271 = sadd.s32 %s269, %s270
      %s272 = smul.addr %s271, 8
      %s273 = scalar_lea.vmem %s0, %s272
      %p274 = pneg %p54
      %p275 = pneg %p51
      %p276 = pneg %p75
      %p277 = pneg %p72
      %p278 = pneg %p96
      %p279 = pneg %p93
      %p280 = pneg %p117
      %p281 = pneg %p114
      %p282 = pneg %p138
      %p283 = pneg %p135
      %p284 = pneg %p159
      %p285 = pneg %p156
      %p286 = pneg %p180
      %p287 = pneg %p177
      %p288 = pneg %p208
      %p289 = pneg %p205
      %s290 = smul.u32 2, %s24
      %p291 = scmp.lt.s32.totalorder %s23, 1
      %s292 = scalar_select %p291, %s23, 1
      %p293 = scmp.lt.s32.totalorder %s290, 1
      %s294 = scalar_select %p293, %s290, 1
      %s295 = smul.addr %s292, 4
      %s296 = sadd.s32 %s294, %s295
      %s297 = smul.addr %s296, 8
      %s298 = scalar_lea.vmem %s7, %s297
      %s299 = smul.u32 2, %s24
      %p300 = scmp.lt.s32.totalorder %s23, 1
      %s301 = scalar_select %p300, %s23, 1
      %p302 = scmp.lt.s32.totalorder %s299, 1
      %s303 = scalar_select %p302, %s299, 1
      %s304 = smul.addr %s301, 4
      %s305 = sadd.s32 %s303, %s304
      %s306 = smul.addr %s305, 8
      %s307 = scalar_lea.vmem %s0, %s306
      %s308 = smul.u32 2, %s24
      %s309 = smul.u32 2, %s24
      %p310 = scmp.lt.s32.totalorder %s23, 1
      %s311 = scalar_select %p310, %s23, 1
      %p312 = scmp.lt.s32.totalorder %s309, 1
      %s313 = scalar_select %p312, %s309, 1
      %s314 = smul.addr %s311, 4
      %s315 = sadd.s32 %s313, %s314
      %s316 = smul.addr %s315, 8
      %s317 = scalar_lea.vmem %s7, %s316
      %s318 = smul.u32 2, %s24
      %v320 = vld [vmem:[%s307] sm:$0xff]
      %v321 = vld [vmem:[%s307 + $0x8] sm:$0xff]
      %v322 = vld [vmem:[%s307 + $0x10] sm:$0xf]
      %v323 = vld [vmem:[%s307 + $0x18] sm:$0xf]
      %v324 = vpack.c.bf16 %v322, %v320
      %v325 = vpack.c.bf16 %v323, %v321
      %s326 = sld [smem:[#allocation2]]
      %v327 = vld [vmem:[%s1] sm:$0xf]
      %v328 = vld [vmem:[%s1 + $0x4] sm:$0xf]
      %v329 = vld [vmem:[%s1 + $0x8] sm:$0xf]
      %v330 = vld [vmem:[%s1 + $0xc] sm:$0xf]
      %v331 = vld [vmem:[%s1 + $0x10] sm:$0xf]
      %v332 = vld [vmem:[%s1 + $0x14] sm:$0xf]
      %v333 = vld [vmem:[%s1 + $0x18] sm:$0xf]
      %v334 = vld [vmem:[%s1 + $0x1c] sm:$0xf]
      %v335 = vld [vmem:[%s1 + $0x20] sm:$0xf]
      %v345 = vunpack.c.l.b16 %v327
      %v346 = vunpack.c.l.b16 %v328
      %v347 = vunpack.c.l.b16 %v329
      %v348 = vunpack.c.l.b16 %v330
      %v349 = vunpack.c.l.b16 %v331
      %v350 = vunpack.c.l.b16 %v332
      %v351 = vunpack.c.l.b16 %v333
      %v352 = vunpack.c.l.b16 %v334
      %v353 = vunpack.c.l.b16 %v335
      %v354 = vpack.c.b16 %v346, %v345
      %v355 = vpack.c.b16 %v348, %v347
      %v356 = vpack.c.b16 %v350, %v349
      %v357 = vpack.c.b16 %v352, %v351
      %v358 = vpack.c.b16 %v353, %v353
      %vm359 = vcmask 97280
      %v361 = vsel %vm359, %v354, 0
      %v364 = vsel %vm359, %v355, 0
      %v367 = vsel %vm359, %v356, 0
      %v370 = vsel %vm359, %v357, 0
      %v373 = vsel %vm359, %v358, 0
      %vm375 = vcmask 1045504
      %v377 = vsel %vm375, %v324, 0
      %v380 = vsel %vm375, %v325, 0
      %382 = vmatprep.subr.bf16.mxu0 %v380
      %383 = vmatpush1.bf16.msra.mxu0 %v377
      %384 = vmatprep.subr.bf16.mxu0 0
      %385 = vmatpush1.bf16.msra.mxu0 0
      %386 = vmatprep.subr.bf16.mxu0 0
      %387 = vmatpush1.bf16.msra.mxu0 0
      %388 = vmatprep.subr.bf16.mxu0 0
      %389 = vmatpush1.bf16.msra.mxu0 0
      %390 = vmatprep.subr.bf16.mxu0 0
      %391 = vmatpush1.bf16.msra.mxu0 0
      %392 = vmatprep.subr.bf16.mxu0 0
      %393 = vmatpush1.bf16.msra.mxu0 0
      %394 = vmatprep.subr.bf16.mxu0 0
      %395 = vmatpush1.bf16.msra.mxu0 0
      %396 = vmatprep.subr.bf16.mxu0 0
      %397 = vmatpush1.bf16.msra.mxu0 0
      %398 = vmatprep.subr.bf16.mxu0 0
      %399 = vmatpush1.bf16.msra.mxu0 0
      %400 = vmatprep.subr.bf16.mxu0 0
      %401 = vmatpush1.bf16.msra.mxu0 0
      %402 = vmatprep.subr.bf16.mxu0 0
      %403 = vmatpush1.bf16.msra.mxu0 0
      %404 = vmatprep.subr.bf16.mxu0 0
      %405 = vmatpush1.bf16.msra.mxu0 0
      %406 = vmatprep.subr.bf16.mxu0 0
      %407 = vmatpush1.bf16.msra.mxu0 0
      %408 = vmatprep.subr.bf16.mxu0 0
      %409 = vmatpush1.bf16.msra.mxu0 0
      %410 = vmatprep.subr.bf16.mxu0 0
      %411 = vmatpush1.bf16.msra.mxu0 0
      %412 = vmatprep.subr.bf16.mxu0 0
      %413 = vmatpush1.bf16.msra.mxu0 0
      %414 = vmatprep.mubr.bf16.mxu0 0
      %415 = vmatmul.mubr.bf16.gmra.mrb[0].mxu0 %v361
      %v416 = vpop.f32.mrb[0].mxu0
      %v417 = vadd.f32 0.0, %v416
      %v418 = vpop.f32.mrb[0].mxu0
      %v419 = vadd.f32 0.0, %v418
      %v420 = vpop.f32.mrb[0].mxu0
      %v421 = vadd.f32 0.0, %v420
      %v422 = vpop.f32.mrb[0].mxu0
      %v423 = vadd.f32 0.0, %v422
      %424 = vmatprep.mubr.bf16.mxu0 0
      %425 = vmatmul.mubr.bf16.gmra.mrb[0].mxu0 %v364
      %v426 = vpop.f32.mrb[0].mxu0
      %v427 = vadd.f32 0.0, %v426
      %v428 = vpop.f32.mrb[0].mxu0
      %v429 = vadd.f32 0.0, %v428
      %v430 = vpop.f32.mrb[0].mxu0
      %v431 = vadd.f32 0.0, %v430
      %v432 = vpop.f32.mrb[0].mxu0
      %v433 = vadd.f32 0.0, %v432
      %434 = vmatprep.mubr.bf16.mxu0 0
      %435 = vmatmul.mubr.bf16.gmra.mrb[0].mxu0 %v367
      %v436 = vpop.f32.mrb[0].mxu0
      %v437 = vadd.f32 0.0, %v436
      %v438 = vpop.f32.mrb[0].mxu0
      %v439 = vadd.f32 0.0, %v438
      %v440 = vpop.f32.mrb[0].mxu0
      %v441 = vadd.f32 0.0, %v440
      %v442 = vpop.f32.mrb[0].mxu0
      %v443 = vadd.f32 0.0, %v442
      %444 = vmatprep.mubr.bf16.mxu0 0
      %445 = vmatmul.mubr.bf16.gmra.mrb[0].mxu0 %v370
      %v446 = vpop.f32.mrb[0].mxu0
      %v447 = vadd.f32 0.0, %v446
      %v448 = vpop.f32.mrb[0].mxu0
      %v449 = vadd.f32 0.0, %v448
      %v450 = vpop.f32.mrb[0].mxu0
      %v451 = vadd.f32 0.0, %v450
      %v452 = vpop.f32.mrb[0].mxu0
      %v453 = vadd.f32 0.0, %v452
      %454 = vmatprep.mubr.bf16.mxu0 0
      %455 = vmatmul.mubr.bf16.gmra.mrb[0].mxu0 %v373
      %v456 = vpop.f32.mrb[0].mxu0
      %v457 = vadd.f32 0.0, %v456
      %v458 = vpop.f32.mrb[0].mxu0
      %v459 = vadd.f32 0.0, %v458
      %v460 = vpop.f32.mrb[0].mxu0
      %v461 = vpop.f32.mrb[0].mxu0
      %462 = vdwg.mxu0
      %v463 = vxor.u32 %v417, 2147483648
      %v464 = vxor.u32 %v419, 2147483648
      %v465 = vxor.u32 %v421, 2147483648
      %v466 = vxor.u32 %v423, 2147483648
      %v467 = vxor.u32 %v427, 2147483648
      %v468 = vxor.u32 %v429, 2147483648
      %v469 = vmul.f32 %v463, 1.442695
      %v470 = vpow.pop %v469
      %v471 = vmul.f32 %v464, 1.442695
      %v472 = vpow.pop %v471
      %v473 = vmul.f32 %v465, 1.442695
      %v474 = vpow.pop %v473
      %v475 = vmul.f32 %v466, 1.442695
      %v476 = vpow.pop %v475
      %v477 = vmul.f32 %v467, 1.442695
      %v478 = vpow.pop %v477
      %v479 = vmul.f32 %v468, 1.442695
      %v480 = vpow.pop %v479
      %v481 = vadd.f32 %v470, 1.0
      %v482 = vadd.f32 %v472, 1.0
      %v483 = vadd.f32 %v474, 1.0
      %v484 = vadd.f32 %v476, 1.0
      %v485 = vadd.f32 %v478, 1.0
      %v486 = vadd.f32 %v480, 1.0
      %v487 = vrcp.pop %v481
      %v488 = vmul.f32 1.0, %v487
      %v489 = vrcp.pop %v482
      %v490 = vmul.f32 1.0, %v489
      %v491 = vrcp.pop %v483
      %v492 = vmul.f32 1.0, %v491
      %v493 = vrcp.pop %v484
      %v494 = vmul.f32 1.0, %v493
      %v495 = vrcp.pop %v485
      %v496 = vmul.f32 1.0, %v495
      %v497 = vrcp.pop %v486
      %v498 = vmul.f32 1.0, %v497
      %v499 = vmul.f32 %v431, %v488
      %v500 = vmul.f32 %v433, %v490
      %v501 = vmul.f32 %v437, %v492
      %v502 = vmul.f32 %v439, %v494
      %v503 = vmul.f32 %v441, %v496
      %v504 = vmul.f32 %v443, %v498
      %vm509 = vcmask 1043456
      %v510 = vrot.slane %v501, 4
      %v511 = vrot.slane %v503, 4
      %v512 = vsel %vm509, %v510, %v511
      %v513 = vrot.slane %v502, 4
      %v514 = vrot.slane %v504, 4
      %v515 = vsel %vm509, %v513, %v514
      %v520 = vadd.f32 %v499, %v512
      %v521 = vadd.f32 %v500, %v515
      %v522 = vadd.f32 %v501, %v511
      %v523 = vadd.f32 %v502, %v514
      %v524 = vld [vmem:[%s2] sm:$0xf]
      %v525 = vld [vmem:[%s2 + $0x4] sm:$0xf]
      %v526 = vld [vmem:[%s2 + $0x8] sm:$0xf]
      %v527 = vld [vmem:[%s2 + $0xc] sm:$0xf]
      %v528 = vld [vmem:[%s2 + $0x10] sm:$0x3]
      %v529 = vpack.c.bf16 %v522, %v520
      %v530 = vpack.c.bf16 %v523, %v521
      %v536 = vunpack.c.l.b16 %v524
      %v537 = vunpack.c.l.b16 %v525
      %v538 = vunpack.c.l.b16 %v526
      %v539 = vunpack.c.l.b16 %v527
      %v540 = vunpack.c.l.b16 %v528
      %v541 = vpack.c.b16 %v537, %v536
      %v542 = vpack.c.b16 %v539, %v538
      %v543 = vpack.c.b16 %v540, %v540
      %v545 = vsel %vm359, %v541, 0
      %v548 = vsel %vm359, %v542, 0
      %v551 = vsel %vm359, %v543, 0
      %v554 = vsel %vm375, %v529, 0
      %v557 = vsel %vm375, %v530, 0
      %559 = vmatprep.subr.bf16.mxu0 %v557
      %560 = vmatpush1.bf16.msra.mxu0 %v554
      %561 = vmatprep.subr.bf16.mxu0 0
      %562 = vmatpush1.bf16.msra.mxu0 0
      %563 = vmatprep.subr.bf16.mxu0 0
      %564 = vmatpush1.bf16.msra.mxu0 0
      %565 = vmatprep.subr.bf16.mxu0 0
      %566 = vmatpush1.bf16.msra.mxu0 0
      %567 = vmatprep.subr.bf16.mxu0 0
      %568 = vmatpush1.bf16.msra.mxu0 0
      %569 = vmatprep.subr.bf16.mxu0 0
      %570 = vmatpush1.bf16.msra.mxu0 0
      %571 = vmatprep.subr.bf16.mxu0 0
      %572 = vmatpush1.bf16.msra.mxu0 0
      %573 = vmatprep.subr.bf16.mxu0 0
      %574 = vmatpush1.bf16.msra.mxu0 0
      %575 = vmatprep.subr.bf16.mxu0 0
      %576 = vmatpush1.bf16.msra.mxu0 0
      %577 = vmatprep.subr.bf16.mxu0 0
      %578 = vmatpush1.bf16.msra.mxu0 0
      %579 = vmatprep.subr.bf16.mxu0 0
      %580 = vmatpush1.bf16.msra.mxu0 0
      %581 = vmatprep.subr.bf16.mxu0 0
      %582 = vmatpush1.bf16.msra.mxu0 0
      %583 = vmatprep.subr.bf16.mxu0 0
      %584 = vmatpush1.bf16.msra.mxu0 0
      %585 = vmatprep.subr.bf16.mxu0 0
      %586 = vmatpush1.bf16.msra.mxu0 0
      %587 = vmatprep.subr.bf16.mxu0 0
      %588 = vmatpush1.bf16.msra.mxu0 0
      %589 = vmatprep.subr.bf16.mxu0 0
      %590 = vmatpush1.bf16.msra.mxu0 0
      %591 = vmatprep.mubr.bf16.mxu0 0
      %592 = vmatmul.mubr.bf16.gmra.mrb[0].mxu0 %v545
      %v593 = vpop.f32.mrb[0].mxu0
      %v594 = vadd.f32 0.0, %v593
      %v595 = vpop.f32.mrb[0].mxu0
      %v596 = vadd.f32 0.0, %v595
      %v597 = vpop.f32.mrb[0].mxu0
      %v598 = vadd.f32 0.0, %v597
      %v599 = vpop.f32.mrb[0].mxu0
      %v600 = vadd.f32 0.0, %v599
      %601 = vmatprep.mubr.bf16.mxu0 0
      %602 = vmatmul.mubr.bf16.gmra.mrb[0].mxu0 %v548
      %v603 = vpop.f32.mrb[0].mxu0
      %v604 = vadd.f32 0.0, %v603
      %v605 = vpop.f32.mrb[0].mxu0
      %v606 = vadd.f32 0.0, %v605
      %v607 = vpop.f32.mrb[0].mxu0
      %v608 = vadd.f32 0.0, %v607
      %v609 = vpop.f32.mrb[0].mxu0
      %v610 = vadd.f32 0.0, %v609
      %611 = vmatprep.mubr.bf16.mxu0 0
      %612 = vmatmul.mubr.bf16.gmra.mrb[0].mxu0 %v551
      %v613 = vpop.f32.mrb[0].mxu0
      %v614 = vadd.f32 0.0, %v613
      %v615 = vpop.f32.mrb[0].mxu0
      %v616 = vadd.f32 0.0, %v615
      %v617 = vpop.f32.mrb[0].mxu0
      %v618 = vpop.f32.mrb[0].mxu0
      %619 = vdwg.mxu0
      %v620 = vadd.f32 %v594, %v447
      %v621 = vadd.f32 %v596, %v449
      %v622 = vadd.f32 %v598, %v451
      %v623 = vadd.f32 %v600, %v453
      %v624 = vadd.f32 %v604, %v457
      %v625 = vadd.f32 %v606, %v459
      %v626 = vld [vmem:[%s4] sm:$0xff]
      %v627 = vld [vmem:[%s4 + $0x8] sm:$0xff]
      %v628 = vld [vmem:[%s4 + $0x10] sm:$0xff]
      %630 = vset.pattern.permute.xlu0 0
      %631 = vperm.xlu0 %630, %v626
      %v632 = vpop.permute.xlu0 %631
      %635 = vset.pattern.permute.xlu0 0
      %636 = vperm.xlu0 %635, %v627
      %v637 = vpop.permute.xlu0 %636
      %640 = vset.pattern.permute.xlu0 0
      %641 = vperm.xlu0 %640, %v628
      %v642 = vpop.permute.xlu0 %641
      %v644 = vadd.f32 %v620, %v632
      %v645 = vadd.f32 %v621, %v632
      %v646 = vadd.f32 %v622, %v637
      %v647 = vadd.f32 %v623, %v637
      %v648 = vadd.f32 %v624, %v642
      %v649 = vadd.f32 %v625, %v642
      %v650 = vxor.u32 %v644, 2147483648
      %v651 = vxor.u32 %v645, 2147483648
      %v652 = vxor.u32 %v646, 2147483648
      %v653 = vxor.u32 %v647, 2147483648
      %v654 = vxor.u32 %v648, 2147483648
      %v655 = vxor.u32 %v649, 2147483648
      %v656 = vmul.f32 %v650, 1.442695
      %v657 = vpow.pop %v656
      %v658 = vmul.f32 %v651, 1.442695
      %v659 = vpow.pop %v658
      %v660 = vmul.f32 %v652, 1.442695
      %v661 = vpow.pop %v660
      %v662 = vmul.f32 %v653, 1.442695
      %v663 = vpow.pop %v662
      %v664 = vmul.f32 %v654, 1.442695
      %v665 = vpow.pop %v664
      %v666 = vmul.f32 %v655, 1.442695
      %v667 = vpow.pop %v666
      %v668 = vadd.f32 %v657, 1.0
      %v669 = vadd.f32 %v659, 1.0
      %v670 = vadd.f32 %v661, 1.0
      %v671 = vadd.f32 %v663, 1.0
      %v672 = vadd.f32 %v665, 1.0
      %v673 = vadd.f32 %v667, 1.0
      %v674 = vrcp.pop %v668
      %v675 = vmul.f32 1.0, %v674
      %v676 = vrcp.pop %v669
      %v677 = vmul.f32 1.0, %v676
      %v678 = vrcp.pop %v670
      %v679 = vmul.f32 1.0, %v678
      %v680 = vrcp.pop %v671
      %v681 = vmul.f32 1.0, %v680
      %v682 = vrcp.pop %v672
      %v683 = vmul.f32 1.0, %v682
      %v684 = vrcp.pop %v673
      %v685 = vmul.f32 1.0, %v684
      %v686 = vmul.f32 %v675, %v320
      %v687 = vmul.f32 %v677, %v321
      %v688 = vmul.f32 %v679, %v322
      %v689 = vmul.f32 %v681, %v323
      %v690 = vpack.c.bf16 %v688, %v686
      %v691 = vpack.c.bf16 %v689, %v687
      %v692 = vld [vmem:[%s3] sm:$0xf]
      %v693 = vld [vmem:[%s3 + $0x4] sm:$0x3]
      %v696 = vunpack.c.l.b16 %v692
      %v697 = vunpack.c.l.b16 %v693
      %v698 = vpack.c.b16 %v697, %v696
      %v700 = vsel %vm359, %v698, 0
      %v703 = vsel %vm375, %v690, 0
      %v706 = vsel %vm375, %v691, 0
      %708 = vmatprep.subr.bf16.mxu0 %v706
      %709 = vmatpush1.bf16.msra.mxu0 %v703
      %710 = vmatprep.subr.bf16.mxu0 0
      %711 = vmatpush1.bf16.msra.mxu0 0
      %712 = vmatprep.subr.bf16.mxu0 0
      %713 = vmatpush1.bf16.msra.mxu0 0
      %714 = vmatprep.subr.bf16.mxu0 0
      %715 = vmatpush1.bf16.msra.mxu0 0
      %716 = vmatprep.subr.bf16.mxu0 0
      %717 = vmatpush1.bf16.msra.mxu0 0
      %718 = vmatprep.subr.bf16.mxu0 0
      %719 = vmatpush1.bf16.msra.mxu0 0
      %720 = vmatprep.subr.bf16.mxu0 0
      %721 = vmatpush1.bf16.msra.mxu0 0
      %722 = vmatprep.subr.bf16.mxu0 0
      %723 = vmatpush1.bf16.msra.mxu0 0
      %724 = vmatprep.subr.bf16.mxu0 0
      %725 = vmatpush1.bf16.msra.mxu0 0
      %726 = vmatprep.subr.bf16.mxu0 0
      %727 = vmatpush1.bf16.msra.mxu0 0
      %728 = vmatprep.subr.bf16.mxu0 0
      %729 = vmatpush1.bf16.msra.mxu0 0
      %730 = vmatprep.subr.bf16.mxu0 0
      %731 = vmatpush1.bf16.msra.mxu0 0
      %732 = vmatprep.subr.bf16.mxu0 0
      %733 = vmatpush1.bf16.msra.mxu0 0
      %734 = vmatprep.subr.bf16.mxu0 0
      %735 = vmatpush1.bf16.msra.mxu0 0
      %736 = vmatprep.subr.bf16.mxu0 0
      %737 = vmatpush1.bf16.msra.mxu0 0
      %738 = vmatprep.subr.bf16.mxu0 0
      %739 = vmatpush1.bf16.msra.mxu0 0
      %740 = vmatprep.mubr.bf16.mxu0 0
      %741 = vmatmul.mubr.bf16.gmra.mrb[0].mxu0 %v700
      %v742 = vpop.f32.mrb[0].mxu0
      %v743 = vadd.f32 0.0, %v742
      %v744 = vpop.f32.mrb[0].mxu0
      %v745 = vadd.f32 0.0, %v744
      %v746 = vpop.f32.mrb[0].mxu0
      %v747 = vadd.f32 0.0, %v746
      %v748 = vpop.f32.mrb[0].mxu0
      %v749 = vadd.f32 0.0, %v748
      %750 = vdwg.mxu0
      %v751 = vadd.f32 %v608, %v743
      %v752 = vadd.f32 %v610, %v745
      %v753 = vadd.f32 %v614, %v747
      %v754 = vadd.f32 %v616, %v749
      %v755 = vld [vmem:[%s5] sm:$0xff]
      %v756 = vld [vmem:[%s5 + $0x8] sm:$0xf]
      %758 = vset.pattern.permute.xlu0 0
      %759 = vperm.xlu0 %758, %v755
      %v760 = vpop.permute.xlu0 %759
      %763 = vset.pattern.permute.xlu0 0
      %764 = vperm.xlu0 %763, %v756
      %v765 = vpop.permute.xlu0 %764
      %v767 = vadd.f32 %v751, %v760
      %v768 = vadd.f32 %v752, %v760
      %v769 = vadd.f32 %v753, %v765
      %v770 = vadd.f32 %v754, %v765
      %v771 = vtanh.pop %v767
      %v772 = vtanh.pop %v768
      %v773 = vtanh.pop %v769
      %v774 = vtanh.pop %v770
      %v775 = vsub.f32 1.0, %v679
      %v776 = vsub.f32 1.0, %v681
      %v777 = vsub.f32 1.0, %v683
      %v778 = vsub.f32 1.0, %v685
      %v783 = vrot.slane %v320, 4
      %v784 = vrot.slane %v321, 4
      %v785 = vrot.slane %v322, 4
      %v786 = vsel %vm509, %v783, %v785
      %v787 = vrot.slane %v323, 4
      %v788 = vsel %vm509, %v784, %v787
      %v793 = vmul.f32 %v775, %v783
      %v794 = vmul.f32 %v776, %v784
      %v795 = vmul.f32 %v777, %v786
      %v796 = vmul.f32 %v778, %v788
      %v801 = vrot.slane %v771, 4
      %v802 = vrot.slane %v772, 4
      %v803 = vrot.slane %v773, 4
      %v804 = vsel %vm509, %v801, %v803
      %v805 = vrot.slane %v774, 4
      %v806 = vsel %vm509, %v802, %v805
      %v811 = vmul.f32 %v679, %v801
      %v812 = vmul.f32 %v681, %v802
      %v813 = vmul.f32 %v683, %v804
      %v814 = vmul.f32 %v685, %v806
      %v815 = vadd.f32 %v793, %v811
      %v816 = vadd.f32 %v794, %v812
      %v817 = vadd.f32 %v795, %v813
      %v818 = vadd.f32 %v796, %v814
      %v819 = vstv %s326
      %v820 = vmul.f32 %v815, %v819
      %v821 = vmul.f32 %v816, %v819
      %v822 = vmul.f32 %v817, %v819
      %v823 = vmul.f32 %v818, %v819
      %v824 = vadd.f32 %v820, %v783
      %v825 = vadd.f32 %v821, %v784
      %v826 = vadd.f32 %v822, %v786
      %v827 = vadd.f32 %v823, %v788
      %v832 = vrot.slane %v824, 4
      %v833 = vrot.slane %v826, 4
      %v834 = vsel %vm509, %v832, %v833
      %v835 = vrot.slane %v825, 4
      %v836 = vrot.slane %v827, 4
      %v837 = vsel %vm509, %v835, %v836
      %842 = vst [vmem:[%s317] sm:$0xff] %v834
      %843 = vst [vmem:[%s317 + $0x8] sm:$0xff] %v837
      %844 = vst [vmem:[%s317 + $0x10] sm:$0xf] %v833
      %845 = vst [vmem:[%s317 + $0x18] sm:$0xf] %v836
      %s846 = smul.u32 2, %s24
      %p847 = scmp.lt.s32.totalorder %s23, 1
      %s848 = scalar_select %p847, %s23, 1
      %p849 = scmp.lt.s32.totalorder %s846, 1
      %s850 = scalar_select %p849, %s846, 1
      %s851 = smul.addr %s848, 4
      %s852 = sadd.s32 %s850, %s851
      %s853 = smul.addr %s852, 8
      %s854 = scalar_lea.vmem %s7, %s853
      // Predicated region
      $region49: #{graph_model_forward.1} parent=47 // pred_check
        %p855 = pneg %p205
      $region50: #{graph_model_forward.1} parent=47 // pred_check_branch
        %857 = sbr.rel (%p855) target = $region52
      $region51: #{graph_model_forward.1} parent=47 // pred_region
        %s858 = smul.u32 2, %s24
      $region52: #{graph_model_forward.1} parent=47 // pred_fallthru
        _
    $region48: #{graph_model_forward.1} parent=5 // pred_fallthru
      _
    %p859 = scmp.le.s32.totalorder 2, %s14
    // Predicated region
    $region53: #{graph_model_forward.1} parent=5 // pred_check
      %p860 = pneg %p859
    $region54: #{graph_model_forward.1} parent=5 // pred_check_branch
      %862 = sbr.rel (%p860) target = $region56
    $region55: #{graph_model_forward.1} parent=5 // pred_region
      %s863 = ssub.s32 %s14, 2
      // Predicated region
      $region57: #{graph_model_forward.1} parent=55 // pred_check
        %p864 = pneg %p211
      $region58: #{graph_model_forward.1} parent=55 // pred_check_branch
        %866 = sbr.rel (%p864) target = $region60
      $region59: #{graph_model_forward.1} parent=55 // pred_region
        %s867 = smul.u32 2, %s26
        %p868 = scmp.lt.s32.totalorder %s25, 1
        %s869 = scalar_select %p868, %s25, 1
        %p870 = scmp.lt.s32.totalorder %s867, 1
        %s871 = scalar_select %p870, %s867, 1
        %s872 = smul.addr %s869, 4
        %s873 = sadd.s32 %s871, %s872
        %s874 = smul.addr %s873, 8
        %s875 = scalar_lea.vmem %s7, %s874
      $region60: #{graph_model_forward.1} parent=55 // pred_fallthru
        _
    $region56: #{graph_model_forward.1} parent=5 // pred_fallthru
      _
  $region6: #{graph_model_forward.1} parent=0 // loop_footer
    %s18 = sadd.s32 1, %s14
  $region7: #{graph_model_forward.1} parent=0 // loop_footer_branch
    %13 = sbr.rel target = $region3
  $region8: #{graph_model_forward.1} parent=0 // loop_exit
    _

</llo_original>
